<compile_context>
chip_gen: v6e
topology: v6e:2x2x1
jax: 0.10.0
libtpu: 0.0.40
codegen_flags: <defaults>
</compile_context>

<pallas_src>
import functools

import jax
import jax.numpy as jnp
from jax import lax
from jax.experimental import pallas as pl
from jax.experimental.pallas import tpu as pltpu  # noqa: F401  (TPU backend)

BN_EPS = 1e-5


def _dqn_kernel(x_ref, w1_ref, w2_ref, w3_ref, wh_ref, vec_ref, q_ref, *, H, H2, A):
    """Fused dueling-DQN forward.

    x_ref   : [B, I]      f32 input
    w1..w3  : [in, out]   bf16 linear weights (biases dropped: cancelled by BN)
    wh_ref  : [H2, 1+A]   bf16 fused value||advantage head weight
    vec_ref : [8, W]      f32 packed per-feature vectors:
                          rows 0/1 gamma1/beta1, 2/3 gamma2/beta2,
                          rows 4/5 gamma3/beta3, row 6 fused head bias, row 7 pad
    q_ref   : [B, A]      f32 output
    """
    x = x_ref[...]
    vec = vec_ref[...]

    def matmul(h, w_ref):
        # bf16 x bf16 -> f32 accumulate on the MXU.
        return jnp.dot(h.astype(jnp.bfloat16), w_ref[...],
                       preferred_element_type=jnp.float32)

    def bn_relu(y, g, beta):
        # Training-mode BatchNorm1d: batch mean, biased variance, one stats pass.
        mu = jnp.mean(y, axis=0, keepdims=True)
        msq = jnp.mean(y * y, axis=0, keepdims=True)
        var = jnp.maximum(msq - mu * mu, 0.0)
        scale = g * lax.rsqrt(var + BN_EPS)          # gamma folded into rsqrt scale
        return jnp.maximum((y - mu) * scale + beta, 0.0)

    h = bn_relu(matmul(x, w1_ref), vec[0:1, :H], vec[1:2, :H])
    h = bn_relu(matmul(h, w2_ref), vec[2:3, :H], vec[3:4, :H])
    h = bn_relu(matmul(h, w3_ref), vec[4:5, :H2], vec[5:6, :H2])

    head = matmul(h, wh_ref) + vec[6:7, :1 + A]      # [B, 1+A] = [value | advantage]
    value = head[:, 0:1]
    adv = head[:, 1:1 + A]
    q = value + adv - jnp.mean(adv, axis=1, keepdims=True)
    q_ref[...] = q.astype(q_ref.dtype)


def _full_spec(shape):
    # Whole-array block, single grid point (entire model fits in a few vregs).
    return pl.BlockSpec(shape, lambda: (0,) * len(shape))


def improved_dqn_forward(x, params):
    """x: [B, input_size] or [input_size]. Returns q_values like the PyTorch forward."""
    squeezed_in = (x.ndim == 1)
    if squeezed_in:
        x = x[None, :]
    x = x.astype(jnp.float32)
    B = x.shape[0]

    H = params["g1"].shape[1]
    H2 = params["g3"].shape[1]
    A = params["wa"].shape[1]
    W = max(H, H2, 1 + A)

    # Pack / fuse operands: 6 kernel inputs instead of 17.
    w1 = params["w1"].astype(jnp.bfloat16)
    w2 = params["w2"].astype(jnp.bfloat16)
    w3 = params["w3"].astype(jnp.bfloat16)
    wh = jnp.concatenate([params["wv"], params["wa"]], axis=1).astype(jnp.bfloat16)
    bh = jnp.concatenate([params["bv"], params["ba"]], axis=1)  # [1, 1+A] f32

    def row(v):
        v = v.astype(jnp.float32)
        return jnp.pad(v, ((0, 0), (0, W - v.shape[1])))

    vec = jnp.concatenate(
        [row(params["g1"]), row(params["be1"]),
         row(params["g2"]), row(params["be2"]),
         row(params["g3"]), row(params["be3"]),
         row(bh), jnp.zeros((1, W), jnp.float32)],
        axis=0)                                                  # [8, W]

    args = (x, w1, w2, w3, wh, vec)
    kernel = functools.partial(_dqn_kernel, H=H, H2=H2, A=A)

    q = pl.pallas_call(
        kernel,
        out_shape=jax.ShapeDtypeStruct((B, A), jnp.float32),
        in_specs=[_full_spec(a.shape) for a in args],
        out_specs=_full_spec((B, A)),
    )(*args)

    if q.shape[0] == 1:
        q = q[0]
    return q


def init_params(key, input_size, hidden_size, output_size):
    """PyTorch-default init. Linear: U(-1/sqrt(fan_in), 1/sqrt(fan_in));
       BatchNorm1d: gamma=1, beta=0. Weights stored [in, out]; vectors [1, out].
       (fc biases b1/b2/b3 are generated for the f32 reference only; the kernel
        drops them since training-mode BN cancels them exactly.)"""
    def linear(k, fan_in, fan_out):
        kw, kb = jax.random.split(k)
        bound = 1.0 / jnp.sqrt(fan_in)
        w = jax.random.uniform(kw, (fan_in, fan_out), jnp.float32, -bound, bound)
        b = jax.random.uniform(kb, (1, fan_out), jnp.float32, -bound, bound)
        return w, b

    k1, k2, k3, kv, ka = jax.random.split(key, 5)
    h2 = hidden_size // 2
    w1, b1 = linear(k1, input_size, hidden_size)
    w2, b2 = linear(k2, hidden_size, hidden_size)
    w3, b3 = linear(k3, hidden_size, h2)
    wv, bv = linear(kv, h2, 1)
    wa, ba = linear(ka, h2, output_size)
    ones = lambda n: jnp.ones((1, n), jnp.float32)
    zeros = lambda n: jnp.zeros((1, n), jnp.float32)
    return dict(
        w1=w1, b1=b1, g1=ones(hidden_size), be1=zeros(hidden_size),
        w2=w2, b2=b2, g2=ones(hidden_size), be2=zeros(hidden_size),
        w3=w3, b3=b3, g3=ones(h2), be3=zeros(h2),
        wv=wv, bv=bv, wa=wa, ba=ba,
    )


def _reference_forward_f32(x, p):
    """Exact PyTorch math in f32 (with fc biases, two-pass BN stats, split heads)."""
    if x.ndim == 1:
        x = x[None, :]

    def block(h, w, b, g, be):
        y = h @ w + b
        mu = jnp.mean(y, axis=0, keepdims=True)
        var = jnp.mean((y - mu) ** 2, axis=0, keepdims=True)
        return jnp.maximum((y - mu) / jnp.sqrt(var + BN_EPS) * g + be, 0.0)

    h = block(x, p["w1"], p["b1"], p["g1"], p["be1"])
    h = block(h, p["w2"], p["b2"], p["g2"], p["be2"])
    h = block(h, p["w3"], p["b3"], p["g3"], p["be3"])
    value = h @ p["wv"] + p["bv"]
    adv = h @ p["wa"] + p["ba"]
    q = value + adv - jnp.mean(adv, axis=1, keepdims=True)
    return q[0] if q.shape[0] == 1 else q


def _reference_forward_bf16(x, p):
    """Plain-JAX mirror of the kernel's structural rewrites (bf16 matmuls, dropped
       fc biases, fused head, one-pass stats, folded gamma) for a tight check."""
    if x.ndim == 1:
        x = x[None, :]
    x = x.astype(jnp.float32)

    def mm(h, w):
        return jnp.dot(h.astype(jnp.bfloat16), w.astype(jnp.bfloat16),
                       preferred_element_type=jnp.float32)

    def bn_relu(y, g, be):
        mu = jnp.mean(y, axis=0, keepdims=True)
        var = jnp.maximum(jnp.mean(y * y, axis=0, keepdims=True) - mu * mu, 0.0)
        return jnp.maximum((y - mu) * (g * lax.rsqrt(var + BN_EPS)) + be, 0.0)

    h = bn_relu(mm(x, p["w1"]), p["g1"], p["be1"])
    h = bn_relu(mm(h, p["w2"]), p["g2"], p["be2"])
    h = bn_relu(mm(h, p["w3"]), p["g3"], p["be3"])
    wh = jnp.concatenate([p["wv"], p["wa"]], axis=1)
    bh = jnp.concatenate([p["bv"], p["ba"]], axis=1)
    head = mm(h, wh) + bh
    value, adv = head[:, :1], head[:, 1:]
    q = value + adv - jnp.mean(adv, axis=1, keepdims=True)
    return q[0] if q.shape[0] == 1 else q


if __name__ == "__main__":
    INPUT_SIZE, HIDDEN_SIZE, OUTPUT_SIZE = 16, 32, 4
    BATCH = 64  # amortize the fixed launch/DMA cost over a bigger batch

    key = jax.random.PRNGKey(0)
    k_params, k_x = jax.random.split(key)
    params = init_params(k_params, INPUT_SIZE, HIDDEN_SIZE, OUTPUT_SIZE)
    x = jax.random.normal(k_x, (BATCH, INPUT_SIZE), jnp.float32)

    q = jax.block_until_ready(improved_dqn_forward(x, params))
    assert q.shape == (BATCH, OUTPUT_SIZE)

    # Tight check: same bf16-matmul structure in plain JAX (validates the
    # bias-cancellation, head fusion, one-pass stats and gamma folding exactly).
    q_struct = jax.block_until_ready(_reference_forward_bf16(x, params))
    assert jnp.allclose(q, q_struct, atol=1e-3, rtol=1e-3)

    # Loose check: exact f32 PyTorch-style math; bf16 matmul quantization is the
    # only difference.
    q_f32 = jax.block_until_ready(_reference_forward_f32(x, params))
    assert jnp.allclose(q, q_f32, atol=1e-1, rtol=1e-2)

    print("KERNEL_OK")
</pallas_src>

<mosaic_0001>
module attributes {stable_mosaic.version = 11 : i64} {
  func.func @_dqn_kernel(%arg0: memref<64x16xf32, #tpu.memory_space<vmem>>, %arg1: memref<16x32xbf16, #tpu.memory_space<vmem>>, %arg2: memref<32x32xbf16, #tpu.memory_space<vmem>>, %arg3: memref<32x16xbf16, #tpu.memory_space<vmem>>, %arg4: memref<16x5xbf16, #tpu.memory_space<vmem>>, %arg5: memref<8x32xf32, #tpu.memory_space<vmem>>, %arg6: memref<64x4xf32, #tpu.memory_space<vmem>>) attributes {dimension_semantics = [], scalar_prefetch = 0 : i64, scratch_operands = 0 : i64, tpu.core_type = #tpu.core_type<tc>} {
    %c0 = arith.constant 0 : index
    %c0_0 = arith.constant 0 : index
    %0 = vector.load %arg0[%c0, %c0_0] : memref<64x16xf32, #tpu.memory_space<vmem>>, vector<64x16xf32>
    %c0_1 = arith.constant 0 : index
    %c0_2 = arith.constant 0 : index
    %1 = vector.load %arg5[%c0_1, %c0_2] : memref<8x32xf32, #tpu.memory_space<vmem>>, vector<8x32xf32>
    %2 = arith.truncf %0 : vector<64x16xf32> to vector<64x16xbf16>
    %c0_3 = arith.constant 0 : index
    %c0_4 = arith.constant 0 : index
    %3 = vector.load %arg1[%c0_3, %c0_4] : memref<16x32xbf16, #tpu.memory_space<vmem>>, vector<16x32xbf16>
    %cst = arith.constant dense<0.000000e+00> : vector<64x32xf32>
    %4 = tpu.matmul %2, %3, %cst {dimension_numbers = #tpu.dot_dimension_numbers<[1], [0], [0], [1], [0, 0, 1, 1], [], []>} : vector<64x16xbf16>, vector<16x32xbf16>, vector<64x32xf32> -> vector<64x32xf32>
    %5 = vector.extract_strided_slice %1 {offsets = [0, 0], sizes = [1, 32], strides = [1, 1]} : vector<8x32xf32> to vector<1x32xf32>
    %6 = vector.extract_strided_slice %1 {offsets = [1, 0], sizes = [1, 32], strides = [1, 1]} : vector<8x32xf32> to vector<1x32xf32>
    %cst_5 = arith.constant dense<0.000000e+00> : vector<32xf32>
    %7 = vector.multi_reduction <add>, %4, %cst_5 [0] : vector<64x32xf32> to vector<32xf32>
    %8 = vector.shape_cast %7 : vector<32xf32> to vector<1x32xf32>
    %cst_6 = arith.constant 6.400000e+01 : f32
    %9 = vector.broadcast %cst_6 : f32 to vector<1x32xf32>
    %10 = arith.divf %8, %9 : vector<1x32xf32>
    %11 = arith.mulf %4, %4 : vector<64x32xf32>
    %cst_7 = arith.constant dense<0.000000e+00> : vector<32xf32>
    %12 = vector.multi_reduction <add>, %11, %cst_7 [0] : vector<64x32xf32> to vector<32xf32>
    %13 = vector.shape_cast %12 : vector<32xf32> to vector<1x32xf32>
    %cst_8 = arith.constant 6.400000e+01 : f32
    %14 = vector.broadcast %cst_8 : f32 to vector<1x32xf32>
    %15 = arith.divf %13, %14 : vector<1x32xf32>
    %16 = arith.mulf %10, %10 : vector<1x32xf32>
    %17 = arith.subf %15, %16 : vector<1x32xf32>
    %cst_9 = arith.constant 0.000000e+00 : f32
    %18 = vector.broadcast %cst_9 : f32 to vector<1x32xf32>
    %19 = arith.maximumf %17, %18 : vector<1x32xf32>
    %cst_10 = arith.constant 9.99999974E-6 : f32
    %20 = vector.broadcast %cst_10 : f32 to vector<1x32xf32>
    %21 = arith.addf %19, %20 : vector<1x32xf32>
    %22 = math.rsqrt %21 : vector<1x32xf32>
    %23 = arith.mulf %5, %22 : vector<1x32xf32>
    %24 = vector.broadcast %10 : vector<1x32xf32> to vector<64x32xf32>
    %25 = arith.subf %4, %24 : vector<64x32xf32>
    %26 = vector.broadcast %23 : vector<1x32xf32> to vector<64x32xf32>
    %27 = arith.mulf %25, %26 : vector<64x32xf32>
    %28 = vector.broadcast %6 : vector<1x32xf32> to vector<64x32xf32>
    %29 = arith.addf %27, %28 : vector<64x32xf32>
    %cst_11 = arith.constant 0.000000e+00 : f32
    %30 = vector.broadcast %cst_11 : f32 to vector<64x32xf32>
    %31 = arith.maximumf %29, %30 : vector<64x32xf32>
    %32 = arith.truncf %31 : vector<64x32xf32> to vector<64x32xbf16>
    %c0_12 = arith.constant 0 : index
    %c0_13 = arith.constant 0 : index
    %33 = vector.load %arg2[%c0_12, %c0_13] : memref<32x32xbf16, #tpu.memory_space<vmem>>, vector<32x32xbf16>
    %cst_14 = arith.constant dense<0.000000e+00> : vector<64x32xf32>
    %34 = tpu.matmul %32, %33, %cst_14 {dimension_numbers = #tpu.dot_dimension_numbers<[1], [0], [0], [1], [0, 0, 1, 1], [], []>} : vector<64x32xbf16>, vector<32x32xbf16>, vector<64x32xf32> -> vector<64x32xf32>
    %35 = vector.extract_strided_slice %1 {offsets = [2, 0], sizes = [1, 32], strides = [1, 1]} : vector<8x32xf32> to vector<1x32xf32>
    %36 = vector.extract_strided_slice %1 {offsets = [3, 0], sizes = [1, 32], strides = [1, 1]} : vector<8x32xf32> to vector<1x32xf32>
    %cst_15 = arith.constant dense<0.000000e+00> : vector<32xf32>
    %37 = vector.multi_reduction <add>, %34, %cst_15 [0] : vector<64x32xf32> to vector<32xf32>
    %38 = vector.shape_cast %37 : vector<32xf32> to vector<1x32xf32>
    %cst_16 = arith.constant 6.400000e+01 : f32
    %39 = vector.broadcast %cst_16 : f32 to vector<1x32xf32>
    %40 = arith.divf %38, %39 : vector<1x32xf32>
    %41 = arith.mulf %34, %34 : vector<64x32xf32>
    %cst_17 = arith.constant dense<0.000000e+00> : vector<32xf32>
    %42 = vector.multi_reduction <add>, %41, %cst_17 [0] : vector<64x32xf32> to vector<32xf32>
    %43 = vector.shape_cast %42 : vector<32xf32> to vector<1x32xf32>
    %cst_18 = arith.constant 6.400000e+01 : f32
    %44 = vector.broadcast %cst_18 : f32 to vector<1x32xf32>
    %45 = arith.divf %43, %44 : vector<1x32xf32>
    %46 = arith.mulf %40, %40 : vector<1x32xf32>
    %47 = arith.subf %45, %46 : vector<1x32xf32>
    %cst_19 = arith.constant 0.000000e+00 : f32
    %48 = vector.broadcast %cst_19 : f32 to vector<1x32xf32>
    %49 = arith.maximumf %47, %48 : vector<1x32xf32>
    %cst_20 = arith.constant 9.99999974E-6 : f32
    %50 = vector.broadcast %cst_20 : f32 to vector<1x32xf32>
    %51 = arith.addf %49, %50 : vector<1x32xf32>
    %52 = math.rsqrt %51 : vector<1x32xf32>
    %53 = arith.mulf %35, %52 : vector<1x32xf32>
    %54 = vector.broadcast %40 : vector<1x32xf32> to vector<64x32xf32>
    %55 = arith.subf %34, %54 : vector<64x32xf32>
    %56 = vector.broadcast %53 : vector<1x32xf32> to vector<64x32xf32>
    %57 = arith.mulf %55, %56 : vector<64x32xf32>
    %58 = vector.broadcast %36 : vector<1x32xf32> to vector<64x32xf32>
    %59 = arith.addf %57, %58 : vector<64x32xf32>
    %cst_21 = arith.constant 0.000000e+00 : f32
    %60 = vector.broadcast %cst_21 : f32 to vector<64x32xf32>
    %61 = arith.maximumf %59, %60 : vector<64x32xf32>
    %62 = arith.truncf %61 : vector<64x32xf32> to vector<64x32xbf16>
    %c0_22 = arith.constant 0 : index
    %c0_23 = arith.constant 0 : index
    %63 = vector.load %arg3[%c0_22, %c0_23] : memref<32x16xbf16, #tpu.memory_space<vmem>>, vector<32x16xbf16>
    %cst_24 = arith.constant dense<0.000000e+00> : vector<64x16xf32>
    %64 = tpu.matmul %62, %63, %cst_24 {dimension_numbers = #tpu.dot_dimension_numbers<[1], [0], [0], [1], [0, 0, 1, 1], [], []>} : vector<64x32xbf16>, vector<32x16xbf16>, vector<64x16xf32> -> vector<64x16xf32>
    %65 = vector.extract_strided_slice %1 {offsets = [4, 0], sizes = [1, 16], strides = [1, 1]} : vector<8x32xf32> to vector<1x16xf32>
    %66 = vector.extract_strided_slice %1 {offsets = [5, 0], sizes = [1, 16], strides = [1, 1]} : vector<8x32xf32> to vector<1x16xf32>
    %cst_25 = arith.constant dense<0.000000e+00> : vector<16xf32>
    %67 = vector.multi_reduction <add>, %64, %cst_25 [0] : vector<64x16xf32> to vector<16xf32>
    %68 = vector.shape_cast %67 : vector<16xf32> to vector<1x16xf32>
    %cst_26 = arith.constant 6.400000e+01 : f32
    %69 = vector.broadcast %cst_26 : f32 to vector<1x16xf32>
    %70 = arith.divf %68, %69 : vector<1x16xf32>
    %71 = arith.mulf %64, %64 : vector<64x16xf32>
    %cst_27 = arith.constant dense<0.000000e+00> : vector<16xf32>
    %72 = vector.multi_reduction <add>, %71, %cst_27 [0] : vector<64x16xf32> to vector<16xf32>
    %73 = vector.shape_cast %72 : vector<16xf32> to vector<1x16xf32>
    %cst_28 = arith.constant 6.400000e+01 : f32
    %74 = vector.broadcast %cst_28 : f32 to vector<1x16xf32>
    %75 = arith.divf %73, %74 : vector<1x16xf32>
    %76 = arith.mulf %70, %70 : vector<1x16xf32>
    %77 = arith.subf %75, %76 : vector<1x16xf32>
    %cst_29 = arith.constant 0.000000e+00 : f32
    %78 = vector.broadcast %cst_29 : f32 to vector<1x16xf32>
    %79 = arith.maximumf %77, %78 : vector<1x16xf32>
    %cst_30 = arith.constant 9.99999974E-6 : f32
    %80 = vector.broadcast %cst_30 : f32 to vector<1x16xf32>
    %81 = arith.addf %79, %80 : vector<1x16xf32>
    %82 = math.rsqrt %81 : vector<1x16xf32>
    %83 = arith.mulf %65, %82 : vector<1x16xf32>
    %84 = vector.broadcast %70 : vector<1x16xf32> to vector<64x16xf32>
    %85 = arith.subf %64, %84 : vector<64x16xf32>
    %86 = vector.broadcast %83 : vector<1x16xf32> to vector<64x16xf32>
    %87 = arith.mulf %85, %86 : vector<64x16xf32>
    %88 = vector.broadcast %66 : vector<1x16xf32> to vector<64x16xf32>
    %89 = arith.addf %87, %88 : vector<64x16xf32>
    %cst_31 = arith.constant 0.000000e+00 : f32
    %90 = vector.broadcast %cst_31 : f32 to vector<64x16xf32>
    %91 = arith.maximumf %89, %90 : vector<64x16xf32>
    %92 = arith.truncf %91 : vector<64x16xf32> to vector<64x16xbf16>
    %c0_32 = arith.constant 0 : index
    %c0_33 = arith.constant 0 : index
    %93 = vector.load %arg4[%c0_32, %c0_33] : memref<16x5xbf16, #tpu.memory_space<vmem>>, vector<16x5xbf16>
    %cst_34 = arith.constant dense<0.000000e+00> : vector<64x5xf32>
    %94 = tpu.matmul %92, %93, %cst_34 {dimension_numbers = #tpu.dot_dimension_numbers<[1], [0], [0], [1], [0, 0, 1, 1], [], []>} : vector<64x16xbf16>, vector<16x5xbf16>, vector<64x5xf32> -> vector<64x5xf32>
    %95 = vector.extract_strided_slice %1 {offsets = [6, 0], sizes = [1, 5], strides = [1, 1]} : vector<8x32xf32> to vector<1x5xf32>
    %96 = vector.broadcast %95 : vector<1x5xf32> to vector<64x5xf32>
    %97 = arith.addf %94, %96 : vector<64x5xf32>
    %98 = vector.extract_strided_slice %97 {offsets = [0, 0], sizes = [64, 1], strides = [1, 1]} : vector<64x5xf32> to vector<64x1xf32>
    %99 = vector.extract_strided_slice %97 {offsets = [0, 1], sizes = [64, 4], strides = [1, 1]} : vector<64x5xf32> to vector<64x4xf32>
    %100 = vector.broadcast %98 : vector<64x1xf32> to vector<64x4xf32>
    %101 = arith.addf %100, %99 : vector<64x4xf32>
    %cst_35 = arith.constant dense<0.000000e+00> : vector<64xf32>
    %102 = vector.multi_reduction <add>, %99, %cst_35 [1] : vector<64x4xf32> to vector<64xf32>
    %103 = vector.shape_cast %102 : vector<64xf32> to vector<64x1xf32>
    %cst_36 = arith.constant 4.000000e+00 : f32
    %104 = vector.broadcast %cst_36 : f32 to vector<64x1xf32>
    %105 = arith.divf %103, %104 : vector<64x1xf32>
    %106 = vector.broadcast %105 : vector<64x1xf32> to vector<64x4xf32>
    %107 = arith.subf %101, %106 : vector<64x4xf32>
    %c0_37 = arith.constant 0 : index
    %c0_38 = arith.constant 0 : index
    %108 = vector.load %arg6[%c0_37, %c0_38] : memref<64x4xf32, #tpu.memory_space<vmem>>, vector<64x4xf32>
    tpu.vector_store %arg6[%c0_37, %c0_38], %107 {strides = array<i32>} : memref<64x4xf32, #tpu.memory_space<vmem>>, vector<64x4xf32>,
    return
  }
}

</mosaic_0001>

<llo_original>
// kernel: tpu_custom_call.1
$region0: #{tpu_custom_call.1}
  #allocation0 [shape = 'u32[]', space=smem, size = 0x4, offset = 0x4, fixed_abs, tag = 'smem constant byte address 0x4 - core index']
  #allocation1 [shape = 'u32[144,128]{1,0:T(1,128)}', space=vmem, size = 0x12000, scoped, tag = 'internal scratch']
  %s0 = inlined_call_operand.vmem [shape: f32[64,16], index: 0, kind: input, shape index: {}]
  %s1 = inlined_call_operand.vmem [shape: bf16[16,32], index: 1, kind: input, shape index: {}]
  %s2 = inlined_call_operand.vmem [shape: bf16[32,32], index: 2, kind: input, shape index: {}]
  %s3 = inlined_call_operand.vmem [shape: bf16[32,16], index: 3, kind: input, shape index: {}]
  %s4 = inlined_call_operand.vmem [shape: bf16[16,5], index: 4, kind: input, shape index: {}]
  %s5 = inlined_call_operand.vmem [shape: f32[8,32], index: 5, kind: input, shape index: {}]
  %s6 = inlined_call_operand.vmem [shape: f32[64,4], index: 6, kind: output, shape index: {}]
  %s7 = sld [smem:[#allocation0]]
  $region34: #{tpu_custom_call.1} parent=0
    _
  %s9 = ssub.s32 1, %s7
  %s10 = scalar_select 0, %s9, %s7
  // Predicated region
  $region2: #{tpu_custom_call.1} parent=0 // pred_check
    _
  $region3: #{tpu_custom_call.1} parent=0 // pred_check_branch
    %12 = sbr.rel (0) target = $region5
  $region4: #{tpu_custom_call.1} parent=0 // pred_region
    _
  $region5: #{tpu_custom_call.1} parent=0 // pred_fallthru
    _
  // Predicated region
  $region6: #{tpu_custom_call.1} parent=0 // pred_check
    _
  $region7: #{tpu_custom_call.1} parent=0 // pred_check_branch
    %14 = sbr.rel (0) target = $region9
  $region8: #{tpu_custom_call.1} parent=0 // pred_region
    _
  $region9: #{tpu_custom_call.1} parent=0 // pred_fallthru
    _
  // Predicated region
  $region10: #{tpu_custom_call.1} parent=0 // pred_check
    _
  $region11: #{tpu_custom_call.1} parent=0 // pred_check_branch
    %16 = sbr.rel (0) target = $region13
  $region12: #{tpu_custom_call.1} parent=0 // pred_region
    _
  $region13: #{tpu_custom_call.1} parent=0 // pred_fallthru
    _
  // Predicated region
  $region14: #{tpu_custom_call.1} parent=0 // pred_check
    _
  $region15: #{tpu_custom_call.1} parent=0 // pred_check_branch
    %18 = sbr.rel (0) target = $region17
  $region16: #{tpu_custom_call.1} parent=0 // pred_region
    _
  $region17: #{tpu_custom_call.1} parent=0 // pred_fallthru
    _
  // Predicated region
  $region18: #{tpu_custom_call.1} parent=0 // pred_check
    _
  $region19: #{tpu_custom_call.1} parent=0 // pred_check_branch
    %20 = sbr.rel (0) target = $region21
  $region20: #{tpu_custom_call.1} parent=0 // pred_region
    _
  $region21: #{tpu_custom_call.1} parent=0 // pred_fallthru
    _
  // Predicated region
  $region22: #{tpu_custom_call.1} parent=0 // pred_check
    _
  $region23: #{tpu_custom_call.1} parent=0 // pred_check_branch
    %22 = sbr.rel (0) target = $region25
  $region24: #{tpu_custom_call.1} parent=0 // pred_region
    _
  $region25: #{tpu_custom_call.1} parent=0 // pred_fallthru
    _
  %v24 = vld [vmem:[%s0] sm:$0xff]
  %v25 = vld [vmem:[%s0 + $0x8] sm:$0xff]
  %v26 = vld [vmem:[%s0 + $0x10] sm:$0xff]
  %v27 = vld [vmem:[%s0 + $0x18] sm:$0xff]
  %v28 = vld [vmem:[%s0 + $0x20] sm:$0xff]
  %v29 = vld [vmem:[%s0 + $0x28] sm:$0xff]
  %v30 = vld [vmem:[%s0 + $0x30] sm:$0xff]
  %v31 = vld [vmem:[%s0 + $0x38] sm:$0xff]
  %v32 = vld [vmem:[%s5] sm:$0xff]
  %v33 = vpack.c.bf16 %v25, %v24
  %v34 = vpack.c.bf16 %v27, %v26
  %v35 = vpack.c.bf16 %v29, %v28
  %v36 = vpack.c.bf16 %v31, %v30
  %v37 = vld [vmem:[%s1] sm:$0xf]
  %v38 = vld [vmem:[%s1 + $0x4] sm:$0xf]
  %v41 = vunpack.c.l.b16 %v37
  %v42 = vunpack.c.l.b16 %v38
  %v43 = vpack.c.b16 %v42, %v41
  %vm45 = vcmask 130048
  %v47 = vsel %vm45, %v33, 0
  %v50 = vsel %vm45, %v34, 0
  %v53 = vsel %vm45, %v35, 0
  %v56 = vsel %vm45, %v36, 0
  %58 = vmatprep.subr.bf16.mxu0 0
  %59 = vmatpush1.bf16.msra.mxu0 0
  %60 = vmatprep.subr.bf16.mxu0 0
  %61 = vmatpush1.bf16.msra.mxu0 0
  %62 = vmatprep.subr.bf16.mxu0 0
  %63 = vmatpush1.bf16.msra.mxu0 0
  %64 = vmatprep.subr.bf16.mxu0 0
  %65 = vmatpush1.bf16.msra.mxu0 0
  %66 = vmatprep.subr.bf16.mxu0 0
  %67 = vmatpush1.bf16.msra.mxu0 0
  %68 = vmatprep.subr.bf16.mxu0 0
  %69 = vmatpush1.bf16.msra.mxu0 0
  %70 = vmatprep.subr.bf16.mxu0 0
  %71 = vmatpush1.bf16.msra.mxu0 0
  %72 = vmatprep.subr.bf16.mxu0 0
  %73 = vmatpush1.bf16.msra.mxu0 %v43
  %74 = vmatprep.subr.bf16.mxu0 0
  %75 = vmatpush2.bf16.msra.mxu0 0
  %76 = vmatprep.subr.bf16.mxu0 0
  %77 = vmatpush2.bf16.msra.mxu0 0
  %78 = vmatprep.subr.bf16.mxu0 0
  %79 = vmatpush2.bf16.msra.mxu0 0
  %80 = vmatprep.subr.bf16.mxu0 0
  %81 = vmatpush2.bf16.msra.mxu0 0
  %82 = vmatprep.subr.bf16.mxu0 0
  %83 = vmatpush2.bf16.msra.mxu0 0
  %84 = vmatprep.subr.bf16.mxu0 0
  %85 = vmatpush2.bf16.msra.mxu0 0
  %86 = vmatprep.subr.bf16.mxu0 0
  %87 = vmatpush2.bf16.msra.mxu0 0
  %88 = vmatprep.subr.bf16.mxu0 0
  %89 = vmatpush2.bf16.msra.mxu0 0
  %90 = vmatprep.mubr.bf16.mxu0 0
  %91 = vmatmul.mubr.bf16.gmra.mxu0 %v47
  %v92 = vpop.f32.mrf.mxu0
  %v93 = vadd.f32 0.0, %v92
  %v94 = vpop.f32.mrf.mxu0
  %v95 = vpop.f32.mrf.mxu0
  %v96 = vadd.f32 0.0, %v95
  %v97 = vpop.f32.mrf.mxu0
  %98 = vmatprep.mubr.bf16.mxu0 0
  %99 = vmatmul.mubr.bf16.gmra.mxu0 %v50
  %v100 = vpop.f32.mrf.mxu0
  %v101 = vadd.f32 0.0, %v100
  %v102 = vpop.f32.mrf.mxu0
  %v103 = vpop.f32.mrf.mxu0
  %v104 = vadd.f32 0.0, %v103
  %v105 = vpop.f32.mrf.mxu0
  %106 = vmatprep.mubr.bf16.mxu0 0
  %107 = vmatmul.mubr.bf16.gmra.mxu0 %v53
  %v108 = vpop.f32.mrf.mxu0
  %v109 = vadd.f32 0.0, %v108
  %v110 = vpop.f32.mrf.mxu0
  %v111 = vpop.f32.mrf.mxu0
  %v112 = vadd.f32 0.0, %v111
  %v113 = vpop.f32.mrf.mxu0
  %114 = vmatprep.mubr.bf16.mxu0 0
  %115 = vmatmul.mubr.bf16.gmra.mxu0 %v56
  %v116 = vpop.f32.mrf.mxu0
  %v117 = vadd.f32 0.0, %v116
  %v118 = vpop.f32.mrf.mxu0
  %v119 = vpop.f32.mrf.mxu0
  %v120 = vadd.f32 0.0, %v119
  %v121 = vpop.f32.mrf.mxu0
  %122 = vdwg.mxu0
  %vm123 = vcmask 261120
  %v124 = vsel %vm123, %v93, 0.0
  %v125 = vsel %vm123, %v96, 0.0
  %v126 = vadd.f32 %v124, %v125
  %v127 = vsel %vm123, %v101, 0.0
  %v128 = vadd.f32 %v126, %v127
  %v129 = vsel %vm123, %v104, 0.0
  %v130 = vadd.f32 %v128, %v129
  %v131 = vsel %vm123, %v109, 0.0
  %v132 = vadd.f32 %v130, %v131
  %v133 = vsel %vm123, %v112, 0.0
  %v134 = vadd.f32 %v132, %v133
  %v135 = vsel %vm123, %v117, 0.0
  %v136 = vadd.f32 %v134, %v135
  %v137 = vsel %vm123, %v120, 0.0
  %v138 = vadd.f32 %v136, %v137
  %v139 = vrot.slane %v138, 4
  %v140 = vadd.f32 %v138, %v139
  %v141 = vrot.slane %v140, 2
  %v142 = vadd.f32 %v140, %v141
  %v143 = vrot.slane %v142, 1
  %v144 = vadd.f32 %v142, %v143
  %v145 = vrcp.pop 64.0
  %v146 = vmul.f32 %v144, %v145
  %v147 = vmul.f32 %v93, %v93
  %v148 = vmul.f32 %v96, %v96
  %v149 = vmul.f32 %v101, %v101
  %v150 = vmul.f32 %v104, %v104
  %v151 = vmul.f32 %v109, %v109
  %v152 = vmul.f32 %v112, %v112
  %v153 = vmul.f32 %v117, %v117
  %v154 = vmul.f32 %v120, %v120
  %v155 = vsel %vm123, %v147, 0.0
  %v156 = vsel %vm123, %v148, 0.0
  %v157 = vadd.f32 %v155, %v156
  %v158 = vsel %vm123, %v149, 0.0
  %v159 = vadd.f32 %v157, %v158
  %v160 = vsel %vm123, %v150, 0.0
  %v161 = vadd.f32 %v159, %v160
  %v162 = vsel %vm123, %v151, 0.0
  %v163 = vadd.f32 %v161, %v162
  %v164 = vsel %vm123, %v152, 0.0
  %v165 = vadd.f32 %v163, %v164
  %v166 = vsel %vm123, %v153, 0.0
  %v167 = vadd.f32 %v165, %v166
  %v168 = vsel %vm123, %v154, 0.0
  %v169 = vadd.f32 %v167, %v168
  %v170 = vrot.slane %v169, 4
  %v171 = vadd.f32 %v169, %v170
  %v172 = vrot.slane %v171, 2
  %v173 = vadd.f32 %v171, %v172
  %v174 = vrot.slane %v173, 1
  %v175 = vadd.f32 %v173, %v174
  %v176 = vmul.f32 %v175, %v145
  %v177 = vmul.f32 %v146, %v146
  %v178 = vsub.f32 %v176, %v177
  %v179 = vmax.f32 %v178, 0.0
  %v180 = vadd.f32 %v179, 1e-05
  %v181 = vrsqrt.pop %v180
  %v182 = vmul.f32 %v32, %v181
  %v183 = vsub.f32 %v93, %v146
  %v184 = vsub.f32 %v96, %v146
  %v185 = vsub.f32 %v101, %v146
  %v186 = vsub.f32 %v104, %v146
  %v187 = vsub.f32 %v109, %v146
  %v188 = vsub.f32 %v112, %v146
  %v189 = vsub.f32 %v117, %v146
  %v190 = vsub.f32 %v120, %v146
  %v191 = vlaneseq
  %v192 = vshrl.u32 %v191, 7
  %v193 = vsub.s32 0, %v192
  %v194 = vrot.slane %v182, %v193
  %v195 = vmul.f32 %v183, %v194
  %v196 = vmul.f32 %v184, %v194
  %v197 = vmul.f32 %v185, %v194
  %v198 = vmul.f32 %v186, %v194
  %v199 = vmul.f32 %v187, %v194
  %v200 = vmul.f32 %v188, %v194
  %v201 = vmul.f32 %v189, %v194
  %v202 = vmul.f32 %v190, %v194
  %v203 = vlaneseq
  %v204 = vshrl.u32 %v203, 7
  %v205 = vsub.s32 1, %v204
  %v206 = vrot.slane %v32, %v205
  %v207 = vadd.f32 %v195, %v206
  %v208 = vadd.f32 %v196, %v206
  %v209 = vadd.f32 %v197, %v206
  %v210 = vadd.f32 %v198, %v206
  %v211 = vadd.f32 %v199, %v206
  %v212 = vadd.f32 %v200, %v206
  %v213 = vadd.f32 %v201, %v206
  %v214 = vadd.f32 %v202, %v206
  %v215 = vmax.f32 %v207, 0.0
  %v216 = vmax.f32 %v208, 0.0
  %v217 = vmax.f32 %v209, 0.0
  %v218 = vmax.f32 %v210, 0.0
  %v219 = vmax.f32 %v211, 0.0
  %v220 = vmax.f32 %v212, 0.0
  %v221 = vmax.f32 %v213, 0.0
  %v222 = vmax.f32 %v214, 0.0
  %v223 = vpack.c.bf16 %v216, %v215
  %v224 = vpack.c.bf16 %v218, %v217
  %v225 = vpack.c.bf16 %v220, %v219
  %v226 = vpack.c.bf16 %v222, %v221
  %v227 = vld [vmem:[%s2] sm:$0xf]
  %v228 = vld [vmem:[%s2 + $0x4] sm:$0xf]
  %v229 = vld [vmem:[%s2 + $0x8] sm:$0xf]
  %v230 = vld [vmem:[%s2 + $0xc] sm:$0xf]
  %v235 = vunpack.c.l.b16 %v227
  %v236 = vunpack.c.l.b16 %v228
  %v237 = vunpack.c.l.b16 %v229
  %v238 = vunpack.c.l.b16 %v230
  %v239 = vpack.c.b16 %v236, %v235
  %v240 = vpack.c.b16 %v238, %v237
  %v244 = vsel %vm123, %v223, 0
  %v247 = vsel %vm123, %v224, 0
  %v250 = vsel %vm123, %v225, 0
  %v253 = vsel %vm123, %v226, 0
  %255 = vmatprep.subr.bf16.mxu0 0
  %256 = vmatpush1.bf16.msra.mxu0 0
  %257 = vmatprep.subr.bf16.mxu0 0
  %258 = vmatpush1.bf16.msra.mxu0 0
  %259 = vmatprep.subr.bf16.mxu0 0
  %260 = vmatpush1.bf16.msra.mxu0 0
  %261 = vmatprep.subr.bf16.mxu0 0
  %262 = vmatpush1.bf16.msra.mxu0 0
  %263 = vmatprep.subr.bf16.mxu0 0
  %264 = vmatpush1.bf16.msra.mxu0 0
  %265 = vmatprep.subr.bf16.mxu0 0
  %266 = vmatpush1.bf16.msra.mxu0 0
  %267 = vmatprep.subr.bf16.mxu0 0
  %268 = vmatpush1.bf16.msra.mxu0 %v240
  %269 = vmatprep.subr.bf16.mxu0 0
  %270 = vmatpush1.bf16.msra.mxu0 %v239
  %271 = vmatprep.subr.bf16.mxu0 0
  %272 = vmatpush2.bf16.msra.mxu0 0
  %273 = vmatprep.subr.bf16.mxu0 0
  %274 = vmatpush2.bf16.msra.mxu0 0
  %275 = vmatprep.subr.bf16.mxu0 0
  %276 = vmatpush2.bf16.msra.mxu0 0
  %277 = vmatprep.subr.bf16.mxu0 0
  %278 = vmatpush2.bf16.msra.mxu0 0
  %279 = vmatprep.subr.bf16.mxu0 0
  %280 = vmatpush2.bf16.msra.mxu0 0
  %281 = vmatprep.subr.bf16.mxu0 0
  %282 = vmatpush2.bf16.msra.mxu0 0
  %283 = vmatprep.subr.bf16.mxu0 0
  %284 = vmatpush2.bf16.msra.mxu0 0
  %285 = vmatprep.subr.bf16.mxu0 0
  %286 = vmatpush2.bf16.msra.mxu0 0
  %287 = vmatprep.mubr.bf16.mxu0 0
  %288 = vmatmul.mubr.bf16.gmra.mxu0 %v244
  %v289 = vpop.f32.mrf.mxu0
  %v290 = vadd.f32 0.0, %v289
  %v291 = vpop.f32.mrf.mxu0
  %v292 = vpop.f32.mrf.mxu0
  %v293 = vadd.f32 0.0, %v292
  %v294 = vpop.f32.mrf.mxu0
  %295 = vmatprep.mubr.bf16.mxu0 0
  %296 = vmatmul.mubr.bf16.gmra.mxu0 %v247
  %v297 = vpop.f32.mrf.mxu0
  %v298 = vadd.f32 0.0, %v297
  %v299 = vpop.f32.mrf.mxu0
  %v300 = vpop.f32.mrf.mxu0
  %v301 = vadd.f32 0.0, %v300
  %v302 = vpop.f32.mrf.mxu0
  %303 = vmatprep.mubr.bf16.mxu0 0
  %304 = vmatmul.mubr.bf16.gmra.mxu0 %v250
  %v305 = vpop.f32.mrf.mxu0
  %v306 = vadd.f32 0.0, %v305
  %v307 = vpop.f32.mrf.mxu0
  %v308 = vpop.f32.mrf.mxu0
  %v309 = vadd.f32 0.0, %v308
  %v310 = vpop.f32.mrf.mxu0
  %311 = vmatprep.mubr.bf16.mxu0 0
  %312 = vmatmul.mubr.bf16.gmra.mxu0 %v253
  %v313 = vpop.f32.mrf.mxu0
  %v314 = vadd.f32 0.0, %v313
  %v315 = vpop.f32.mrf.mxu0
  %v316 = vpop.f32.mrf.mxu0
  %v317 = vadd.f32 0.0, %v316
  %v318 = vpop.f32.mrf.mxu0
  %319 = vdwg.mxu0
  %v320 = vsel %vm123, %v290, 0.0
  %v321 = vsel %vm123, %v293, 0.0
  %v322 = vadd.f32 %v320, %v321
  %v323 = vsel %vm123, %v298, 0.0
  %v324 = vadd.f32 %v322, %v323
  %v325 = vsel %vm123, %v301, 0.0
  %v326 = vadd.f32 %v324, %v325
  %v327 = vsel %vm123, %v306, 0.0
  %v328 = vadd.f32 %v326, %v327
  %v329 = vsel %vm123, %v309, 0.0
  %v330 = vadd.f32 %v328, %v329
  %v331 = vsel %vm123, %v314, 0.0
  %v332 = vadd.f32 %v330, %v331
  %v333 = vsel %vm123, %v317, 0.0
  %v334 = vadd.f32 %v332, %v333
  %v335 = vrot.slane %v334, 4
  %v336 = vadd.f32 %v334, %v335
  %v337 = vrot.slane %v336, 2
  %v338 = vadd.f32 %v336, %v337
  %v339 = vrot.slane %v338, 1
  %v340 = vadd.f32 %v338, %v339
  %v341 = vmul.f32 %v340, %v145
  %v342 = vmul.f32 %v290, %v290
  %v343 = vmul.f32 %v293, %v293
  %v344 = vmul.f32 %v298, %v298
  %v345 = vmul.f32 %v301, %v301
  %v346 = vmul.f32 %v306, %v306
  %v347 = vmul.f32 %v309, %v309
  %v348 = vmul.f32 %v314, %v314
  %v349 = vmul.f32 %v317, %v317
  %v350 = vsel %vm123, %v342, 0.0
  %v351 = vsel %vm123, %v343, 0.0
  %v352 = vadd.f32 %v350, %v351
  %v353 = vsel %vm123, %v344, 0.0
  %v354 = vadd.f32 %v352, %v353
  %v355 = vsel %vm123, %v345, 0.0
  %v356 = vadd.f32 %v354, %v355
  %v357 = vsel %vm123, %v346, 0.0
  %v358 = vadd.f32 %v356, %v357
  %v359 = vsel %vm123, %v347, 0.0
  %v360 = vadd.f32 %v358, %v359
  %v361 = vsel %vm123, %v348, 0.0
  %v362 = vadd.f32 %v360, %v361
  %v363 = vsel %vm123, %v349, 0.0
  %v364 = vadd.f32 %v362, %v363
  %v365 = vrot.slane %v364, 4
  %v366 = vadd.f32 %v364, %v365
  %v367 = vrot.slane %v366, 2
  %v368 = vadd.f32 %v366, %v367
  %v369 = vrot.slane %v368, 1
  %v370 = vadd.f32 %v368, %v369
  %v371 = vmul.f32 %v370, %v145
  %v372 = vmul.f32 %v341, %v341
  %v373 = vsub.f32 %v371, %v372
  %v374 = vmax.f32 %v373, 0.0
  %v375 = vadd.f32 %v374, 1e-05
  %v376 = vrsqrt.pop %v375
  %v377 = vmul.f32 %v32, %v376
  %v378 = vsub.f32 %v290, %v341
  %v379 = vsub.f32 %v293, %v341
  %v380 = vsub.f32 %v298, %v341
  %v381 = vsub.f32 %v301, %v341
  %v382 = vsub.f32 %v306, %v341
  %v383 = vsub.f32 %v309, %v341
  %v384 = vsub.f32 %v314, %v341
  %v385 = vsub.f32 %v317, %v341
  %v386 = vlaneseq
  %v387 = vshrl.u32 %v386, 7
  %v388 = vsub.s32 2, %v387
  %v389 = vrot.slane %v377, %v388
  %v390 = vmul.f32 %v378, %v389
  %v391 = vmul.f32 %v379, %v389
  %v392 = vmul.f32 %v380, %v389
  %v393 = vmul.f32 %v381, %v389
  %v394 = vmul.f32 %v382, %v389
  %v395 = vmul.f32 %v383, %v389
  %v396 = vmul.f32 %v384, %v389
  %v397 = vmul.f32 %v385, %v389
  %v398 = vlaneseq
  %v399 = vshrl.u32 %v398, 7
  %v400 = vsub.s32 3, %v399
  %v401 = vrot.slane %v32, %v400
  %v402 = vadd.f32 %v390, %v401
  %v403 = vadd.f32 %v391, %v401
  %v404 = vadd.f32 %v392, %v401
  %v405 = vadd.f32 %v393, %v401
  %v406 = vadd.f32 %v394, %v401
  %v407 = vadd.f32 %v395, %v401
  %v408 = vadd.f32 %v396, %v401
  %v409 = vadd.f32 %v397, %v401
  %v410 = vmax.f32 %v402, 0.0
  %v411 = vmax.f32 %v403, 0.0
  %v412 = vmax.f32 %v404, 0.0
  %v413 = vmax.f32 %v405, 0.0
  %v414 = vmax.f32 %v406, 0.0
  %v415 = vmax.f32 %v407, 0.0
  %v416 = vmax.f32 %v408, 0.0
  %v417 = vmax.f32 %v409, 0.0
  %v418 = vpack.c.bf16 %v411, %v410
  %v419 = vpack.c.bf16 %v413, %v412
  %v420 = vpack.c.bf16 %v415, %v414
  %v421 = vpack.c.bf16 %v417, %v416
  %v422 = vld [vmem:[%s3] sm:$0xf]
  %v423 = vld [vmem:[%s3 + $0x4] sm:$0xf]
  %v424 = vld [vmem:[%s3 + $0x8] sm:$0xf]
  %v425 = vld [vmem:[%s3 + $0xc] sm:$0xf]
  %v430 = vunpack.c.l.b16 %v422
  %v431 = vunpack.c.l.b16 %v423
  %v432 = vunpack.c.l.b16 %v424
  %v433 = vunpack.c.l.b16 %v425
  %v434 = vpack.c.b16 %v431, %v430
  %v435 = vpack.c.b16 %v433, %v432
  %v439 = vsel %vm123, %v418, 0
  %v442 = vsel %vm123, %v419, 0
  %v445 = vsel %vm123, %v420, 0
  %v448 = vsel %vm123, %v421, 0
  %450 = vmatprep.subr.bf16.mxu0 0
  %451 = vmatpush1.bf16.msra.mxu0 0
  %452 = vmatprep.subr.bf16.mxu0 0
  %453 = vmatpush1.bf16.msra.mxu0 0
  %454 = vmatprep.subr.bf16.mxu0 0
  %455 = vmatpush1.bf16.msra.mxu0 0
  %456 = vmatprep.subr.bf16.mxu0 0
  %457 = vmatpush1.bf16.msra.mxu0 0
  %458 = vmatprep.subr.bf16.mxu0 0
  %459 = vmatpush1.bf16.msra.mxu0 0
  %460 = vmatprep.subr.bf16.mxu0 0
  %461 = vmatpush1.bf16.msra.mxu0 0
  %462 = vmatprep.subr.bf16.mxu0 0
  %463 = vmatpush1.bf16.msra.mxu0 %v435
  %464 = vmatprep.subr.bf16.mxu0 0
  %465 = vmatpush1.bf16.msra.mxu0 %v434
  %466 = vmatprep.subr.bf16.mxu0 0
  %467 = vmatpush2.bf16.msra.mxu0 0
  %468 = vmatprep.subr.bf16.mxu0 0
  %469 = vmatpush2.bf16.msra.mxu0 0
  %470 = vmatprep.subr.bf16.mxu0 0
  %471 = vmatpush2.bf16.msra.mxu0 0
  %472 = vmatprep.subr.bf16.mxu0 0
  %473 = vmatpush2.bf16.msra.mxu0 0
  %474 = vmatprep.subr.bf16.mxu0 0
  %475 = vmatpush2.bf16.msra.mxu0 0
  %476 = vmatprep.subr.bf16.mxu0 0
  %477 = vmatpush2.bf16.msra.mxu0 0
  %478 = vmatprep.subr.bf16.mxu0 0
  %479 = vmatpush2.bf16.msra.mxu0 0
  %480 = vmatprep.subr.bf16.mxu0 0
  %481 = vmatpush2.bf16.msra.mxu0 0
  %482 = vmatprep.mubr.bf16.mxu0 0
  %483 = vmatmul.mubr.bf16.gmra.mxu0 %v439
  %v484 = vpop.f32.mrf.mxu0
  %v485 = vadd.f32 0.0, %v484
  %v486 = vpop.f32.mrf.mxu0
  %v487 = vpop.f32.mrf.mxu0
  %v488 = vadd.f32 0.0, %v487
  %v489 = vpop.f32.mrf.mxu0
  %490 = vmatprep.mubr.bf16.mxu0 0
  %491 = vmatmul.mubr.bf16.gmra.mxu0 %v442
  %v492 = vpop.f32.mrf.mxu0
  %v493 = vadd.f32 0.0, %v492
  %v494 = vpop.f32.mrf.mxu0
  %v495 = vpop.f32.mrf.mxu0
  %v496 = vadd.f32 0.0, %v495
  %v497 = vpop.f32.mrf.mxu0
  %498 = vmatprep.mubr.bf16.mxu0 0
  %499 = vmatmul.mubr.bf16.gmra.mxu0 %v445
  %v500 = vpop.f32.mrf.mxu0
  %v501 = vadd.f32 0.0, %v500
  %v502 = vpop.f32.mrf.mxu0
  %v503 = vpop.f32.mrf.mxu0
  %v504 = vadd.f32 0.0, %v503
  %v505 = vpop.f32.mrf.mxu0
  %506 = vmatprep.mubr.bf16.mxu0 0
  %507 = vmatmul.mubr.bf16.gmra.mxu0 %v448
  %v508 = vpop.f32.mrf.mxu0
  %v509 = vadd.f32 0.0, %v508
  %v510 = vpop.f32.mrf.mxu0
  %v511 = vpop.f32.mrf.mxu0
  %v512 = vadd.f32 0.0, %v511
  %v513 = vpop.f32.mrf.mxu0
  %514 = vdwg.mxu0
  %v515 = vsel %vm45, %v485, 0.0
  %v516 = vsel %vm45, %v488, 0.0
  %v517 = vadd.f32 %v515, %v516
  %v518 = vsel %vm45, %v493, 0.0
  %v519 = vadd.f32 %v517, %v518
  %v520 = vsel %vm45, %v496, 0.0
  %v521 = vadd.f32 %v519, %v520
  %v522 = vsel %vm45, %v501, 0.0
  %v523 = vadd.f32 %v521, %v522
  %v524 = vsel %vm45, %v504, 0.0
  %v525 = vadd.f32 %v523, %v524
  %v526 = vsel %vm45, %v509, 0.0
  %v527 = vadd.f32 %v525, %v526
  %v528 = vsel %vm45, %v512, 0.0
  %v529 = vadd.f32 %v527, %v528
  %v530 = vrot.slane %v529, 4
  %v531 = vadd.f32 %v529, %v530
  %v532 = vrot.slane %v531, 2
  %v533 = vadd.f32 %v531, %v532
  %v534 = vrot.slane %v533, 1
  %v535 = vadd.f32 %v533, %v534
  %v536 = vmul.f32 %v535, %v145
  %v537 = vmul.f32 %v485, %v485
  %v538 = vmul.f32 %v488, %v488
  %v539 = vmul.f32 %v493, %v493
  %v540 = vmul.f32 %v496, %v496
  %v541 = vmul.f32 %v501, %v501
  %v542 = vmul.f32 %v504, %v504
  %v543 = vmul.f32 %v509, %v509
  %v544 = vmul.f32 %v512, %v512
  %v545 = vsel %vm45, %v537, 0.0
  %v546 = vsel %vm45, %v538, 0.0
  %v547 = vadd.f32 %v545, %v546
  %v548 = vsel %vm45, %v539, 0.0
  %v549 = vadd.f32 %v547, %v548
  %v550 = vsel %vm45, %v540, 0.0
  %v551 = vadd.f32 %v549, %v550
  %v552 = vsel %vm45, %v541, 0.0
  %v553 = vadd.f32 %v551, %v552
  %v554 = vsel %vm45, %v542, 0.0
  %v555 = vadd.f32 %v553, %v554
  %v556 = vsel %vm45, %v543, 0.0
  %v557 = vadd.f32 %v555, %v556
  %v558 = vsel %vm45, %v544, 0.0
  %v559 = vadd.f32 %v557, %v558
  %v560 = vrot.slane %v559, 4
  %v561 = vadd.f32 %v559, %v560
  %v562 = vrot.slane %v561, 2
  %v563 = vadd.f32 %v561, %v562
  %v564 = vrot.slane %v563, 1
  %v565 = vadd.f32 %v563, %v564
  %v566 = vmul.f32 %v565, %v145
  %v567 = vmul.f32 %v536, %v536
  %v568 = vsub.f32 %v566, %v567
  %v569 = vmax.f32 %v568, 0.0
  %v570 = vadd.f32 %v569, 1e-05
  %v571 = vrsqrt.pop %v570
  %v572 = vmul.f32 %v32, %v571
  %v573 = vsub.f32 %v485, %v536
  %v574 = vsub.f32 %v488, %v536
  %v575 = vsub.f32 %v493, %v536
  %v576 = vsub.f32 %v496, %v536
  %v577 = vsub.f32 %v501, %v536
  %v578 = vsub.f32 %v504, %v536
  %v579 = vsub.f32 %v509, %v536
  %v580 = vsub.f32 %v512, %v536
  %v581 = vlaneseq
  %v582 = vshrl.u32 %v581, 7
  %v583 = vsub.s32 4, %v582
  %v584 = vrot.slane %v572, %v583
  %v585 = vmul.f32 %v573, %v584
  %v586 = vmul.f32 %v574, %v584
  %v587 = vmul.f32 %v575, %v584
  %v588 = vmul.f32 %v576, %v584
  %v589 = vmul.f32 %v577, %v584
  %v590 = vmul.f32 %v578, %v584
  %v591 = vmul.f32 %v579, %v584
  %v592 = vmul.f32 %v580, %v584
  %v593 = vlaneseq
  %v594 = vshrl.u32 %v593, 7
  %v595 = vsub.s32 5, %v594
  %v596 = vrot.slane %v32, %v595
  %v597 = vadd.f32 %v585, %v596
  %v598 = vadd.f32 %v586, %v596
  %v599 = vadd.f32 %v587, %v596
  %v600 = vadd.f32 %v588, %v596
  %v601 = vadd.f32 %v589, %v596
  %v602 = vadd.f32 %v590, %v596
  %v603 = vadd.f32 %v591, %v596
  %v604 = vadd.f32 %v592, %v596
  %v605 = vmax.f32 %v597, 0.0
  %v606 = vmax.f32 %v598, 0.0
  %v607 = vmax.f32 %v599, 0.0
  %v608 = vmax.f32 %v600, 0.0
  %v609 = vmax.f32 %v601, 0.0
  %v610 = vmax.f32 %v602, 0.0
  %v611 = vmax.f32 %v603, 0.0
  %v612 = vmax.f32 %v604, 0.0
  %v613 = vpack.c.bf16 %v606, %v605
  %v614 = vpack.c.bf16 %v608, %v607
  %v615 = vpack.c.bf16 %v610, %v609
  %v616 = vpack.c.bf16 %v612, %v611
  %v617 = vld [vmem:[%s4] sm:$0xf]
  %v618 = vld [vmem:[%s4 + $0x4] sm:$0xf]
  %v619 = vlaneseq
  %v620 = vshrl.u32 %v619, 7
  %v621 = vsub.s32 6, %v620
  %v622 = vrot.slane %v32, %v621
  %v625 = vunpack.c.l.b16 %v617
  %v626 = vunpack.c.l.b16 %v618
  %v627 = vpack.c.b16 %v626, %v625
  %v630 = vsel %vm45, %v613, 0
  %v633 = vsel %vm45, %v614, 0
  %v636 = vsel %vm45, %v615, 0
  %v639 = vsel %vm45, %v616, 0
  %641 = vmatprep.subr.bf16.mxu0 0
  %642 = vmatpush1.bf16.msra.mxu0 0
  %643 = vmatprep.subr.bf16.mxu0 0
  %644 = vmatpush1.bf16.msra.mxu0 0
  %645 = vmatprep.subr.bf16.mxu0 0
  %646 = vmatpush1.bf16.msra.mxu0 0
  %647 = vmatprep.subr.bf16.mxu0 0
  %648 = vmatpush1.bf16.msra.mxu0 0
  %649 = vmatprep.subr.bf16.mxu0 0
  %650 = vmatpush1.bf16.msra.mxu0 0
  %651 = vmatprep.subr.bf16.mxu0 0
  %652 = vmatpush1.bf16.msra.mxu0 0
  %653 = vmatprep.subr.bf16.mxu0 0
  %654 = vmatpush1.bf16.msra.mxu0 0
  %655 = vmatprep.subr.bf16.mxu0 0
  %656 = vmatpush1.bf16.msra.mxu0 %v627
  %657 = vmatprep.subr.bf16.mxu0 0
  %658 = vmatpush2.bf16.msra.mxu0 0
  %659 = vmatprep.subr.bf16.mxu0 0
  %660 = vmatpush2.bf16.msra.mxu0 0
  %661 = vmatprep.subr.bf16.mxu0 0
  %662 = vmatpush2.bf16.msra.mxu0 0
  %663 = vmatprep.subr.bf16.mxu0 0
  %664 = vmatpush2.bf16.msra.mxu0 0
  %665 = vmatprep.subr.bf16.mxu0 0
  %666 = vmatpush2.bf16.msra.mxu0 0
  %667 = vmatprep.subr.bf16.mxu0 0
  %668 = vmatpush2.bf16.msra.mxu0 0
  %669 = vmatprep.subr.bf16.mxu0 0
  %670 = vmatpush2.bf16.msra.mxu0 0
  %671 = vmatprep.subr.bf16.mxu0 0
  %672 = vmatpush2.bf16.msra.mxu0 0
  %673 = vmatprep.mubr.bf16.mxu0 0
  %674 = vmatmul.mubr.bf16.gmra.mxu0 %v630
  %v675 = vpop.f32.mrf.mxu0
  %v676 = vadd.f32 %v622, %v675
  %v677 = vpop.f32.mrf.mxu0
  %v678 = vpop.f32.mrf.mxu0
  %v679 = vadd.f32 %v622, %v678
  %v680 = vpop.f32.mrf.mxu0
  %681 = vmatprep.mubr.bf16.mxu0 0
  %682 = vmatmul.mubr.bf16.gmra.mxu0 %v633
  %v683 = vpop.f32.mrf.mxu0
  %v684 = vadd.f32 %v622, %v683
  %v685 = vpop.f32.mrf.mxu0
  %v686 = vpop.f32.mrf.mxu0
  %v687 = vadd.f32 %v622, %v686
  %v688 = vpop.f32.mrf.mxu0
  %689 = vmatprep.mubr.bf16.mxu0 0
  %690 = vmatmul.mubr.bf16.gmra.mxu0 %v636
  %v691 = vpop.f32.mrf.mxu0
  %v692 = vadd.f32 %v622, %v691
  %v693 = vpop.f32.mrf.mxu0
  %v694 = vpop.f32.mrf.mxu0
  %v695 = vadd.f32 %v622, %v694
  %v696 = vpop.f32.mrf.mxu0
  %697 = vmatprep.mubr.bf16.mxu0 0
  %698 = vmatmul.mubr.bf16.gmra.mxu0 %v639
  %v699 = vpop.f32.mrf.mxu0
  %v700 = vadd.f32 %v622, %v699
  %v701 = vpop.f32.mrf.mxu0
  %v702 = vpop.f32.mrf.mxu0
  %v703 = vadd.f32 %v622, %v702
  %v704 = vpop.f32.mrf.mxu0
  %705 = vdwg.mxu0
  %707 = vset.pattern.permute.xlu0 0
  %708 = vperm.xlu0 %707, %v676
  %v709 = vpop.permute.xlu0 %708
  %712 = vset.pattern.permute.xlu0 0
  %713 = vperm.xlu0 %712, %v679
  %v714 = vpop.permute.xlu0 %713
  %717 = vset.pattern.permute.xlu0 0
  %718 = vperm.xlu0 %717, %v684
  %v719 = vpop.permute.xlu0 %718
  %722 = vset.pattern.permute.xlu0 0
  %723 = vperm.xlu0 %722, %v687
  %v724 = vpop.permute.xlu0 %723
  %727 = vset.pattern.permute.xlu0 0
  %728 = vperm.xlu0 %727, %v692
  %v729 = vpop.permute.xlu0 %728
  %732 = vset.pattern.permute.xlu0 0
  %733 = vperm.xlu0 %732, %v695
  %v734 = vpop.permute.xlu0 %733
  %737 = vset.pattern.permute.xlu0 0
  %738 = vperm.xlu0 %737, %v700
  %v739 = vpop.permute.xlu0 %738
  %742 = vset.pattern.permute.xlu0 0
  %743 = vperm.xlu0 %742, %v703
  %v744 = vpop.permute.xlu0 %743
  %v746 = vadd.f32 %v709, %v676
  %v747 = vadd.f32 %v714, %v679
  %v748 = vadd.f32 %v719, %v684
  %v749 = vadd.f32 %v724, %v687
  %v750 = vadd.f32 %v729, %v692
  %v751 = vadd.f32 %v734, %v695
  %v752 = vadd.f32 %v739, %v700
  %v753 = vadd.f32 %v744, %v703
  %754 = vrot.lane.b32.xlu0 %v676, 127
  %v755 = vpop.permute.xlu0 %754
  %756 = vrot.lane.b32.xlu0 %v679, 127
  %v757 = vpop.permute.xlu0 %756
  %758 = vrot.lane.b32.xlu0 %v684, 127
  %v759 = vpop.permute.xlu0 %758
  %760 = vrot.lane.b32.xlu0 %v687, 127
  %v761 = vpop.permute.xlu0 %760
  %762 = vrot.lane.b32.xlu0 %v692, 127
  %v763 = vpop.permute.xlu0 %762
  %764 = vrot.lane.b32.xlu0 %v695, 127
  %v765 = vpop.permute.xlu0 %764
  %766 = vrot.lane.b32.xlu0 %v700, 127
  %v767 = vpop.permute.xlu0 %766
  %768 = vrot.lane.b32.xlu0 %v703, 127
  %v769 = vpop.permute.xlu0 %768
  %vm778 = vcmask 31744
  %v779 = vsel %vm778, %v755, 0.0
  %780 = vadd.xlane.f32.xlu0 %v779
  %v781 = vpop.xlane.xlu0 %780
  %v782 = vsel %vm778, %v757, 0.0
  %783 = vadd.xlane.f32.xlu0 %v782
  %v784 = vpop.xlane.xlu0 %783
  %v785 = vsel %vm778, %v759, 0.0
  %786 = vadd.xlane.f32.xlu0 %v785
  %v787 = vpop.xlane.xlu0 %786
  %v788 = vsel %vm778, %v761, 0.0
  %789 = vadd.xlane.f32.xlu0 %v788
  %v790 = vpop.xlane.xlu0 %789
  %v791 = vsel %vm778, %v763, 0.0
  %792 = vadd.xlane.f32.xlu0 %v791
  %v793 = vpop.xlane.xlu0 %792
  %v794 = vsel %vm778, %v765, 0.0
  %795 = vadd.xlane.f32.xlu0 %v794
  %v796 = vpop.xlane.xlu0 %795
  %v797 = vsel %vm778, %v767, 0.0
  %798 = vadd.xlane.f32.xlu0 %v797
  %v799 = vpop.xlane.xlu0 %798
  %v800 = vsel %vm778, %v769, 0.0
  %801 = vadd.xlane.f32.xlu0 %v800
  %v802 = vpop.xlane.xlu0 %801
  %v803 = vrcp.pop 4.0
  %v804 = vmul.f32 %v781, %v803
  %v805 = vmul.f32 %v784, %v803
  %v806 = vmul.f32 %v787, %v803
  %v807 = vmul.f32 %v790, %v803
  %v808 = vmul.f32 %v793, %v803
  %v809 = vmul.f32 %v796, %v803
  %v810 = vmul.f32 %v799, %v803
  %v811 = vmul.f32 %v802, %v803
  %v812 = vsub.f32 %v746, %v804
  %v813 = vsub.f32 %v747, %v805
  %v814 = vsub.f32 %v748, %v806
  %v815 = vsub.f32 %v749, %v807
  %v816 = vsub.f32 %v750, %v808
  %v817 = vsub.f32 %v751, %v809
  %v818 = vsub.f32 %v752, %v810
  %v819 = vsub.f32 %v753, %v811
  %828 = vrot.lane.b32.xlu0 %v812, 127
  %v829 = vpop.permute.xlu0 %828
  %830 = vrot.lane.b32.xlu0 %v813, 127
  %v831 = vpop.permute.xlu0 %830
  %832 = vrot.lane.b32.xlu0 %v814, 127
  %v833 = vpop.permute.xlu0 %832
  %834 = vrot.lane.b32.xlu0 %v815, 127
  %v835 = vpop.permute.xlu0 %834
  %836 = vrot.lane.b32.xlu0 %v816, 127
  %v837 = vpop.permute.xlu0 %836
  %838 = vrot.lane.b32.xlu0 %v817, 127
  %v839 = vpop.permute.xlu0 %838
  %840 = vrot.lane.b32.xlu0 %v818, 127
  %v841 = vpop.permute.xlu0 %840
  %842 = vrot.lane.b32.xlu0 %v819, 127
  %v843 = vpop.permute.xlu0 %842
  %852 = vst.msk [vmem:[%s6] sm:$0xff] %vm778, %v829
  %853 = vst.msk [vmem:[%s6 + $0x8] sm:$0xff] %vm778, %v831
  %854 = vst.msk [vmem:[%s6 + $0x10] sm:$0xff] %vm778, %v833
  %855 = vst.msk [vmem:[%s6 + $0x18] sm:$0xff] %vm778, %v835
  %856 = vst.msk [vmem:[%s6 + $0x20] sm:$0xff] %vm778, %v837
  %857 = vst.msk [vmem:[%s6 + $0x28] sm:$0xff] %vm778, %v839
  %858 = vst.msk [vmem:[%s6 + $0x30] sm:$0xff] %vm778, %v841
  %859 = vst.msk [vmem:[%s6 + $0x38] sm:$0xff] %vm778, %v843
  // Predicated region
  $region26: #{tpu_custom_call.1} parent=0 // pred_check
    _
  $region27: #{tpu_custom_call.1} parent=0 // pred_check_branch
    %861 = sbr.rel (0) target = $region29
  $region28: #{tpu_custom_call.1} parent=0 // pred_region
    _
  $region29: #{tpu_custom_call.1} parent=0 // pred_fallthru
    _
  // Predicated region
  $region30: #{tpu_custom_call.1} parent=0 // pred_check
    _
  $region31: #{tpu_custom_call.1} parent=0 // pred_check_branch
    %863 = sbr.rel (0) target = $region33
  $region32: #{tpu_custom_call.1} parent=0 // pred_region
    _
  $region33: #{tpu_custom_call.1} parent=0 // pred_fallthru
    _

</llo_original>
